<compile_context>
chip_gen: v7x
topology: tpu7x:2x2x1
jax: 0.10.0
libtpu: 0.0.40
codegen_flags: <defaults>
</compile_context>

<pallas_src>
import functools

import jax
import jax.numpy as jnp
from jax.experimental import pallas as pl
from jax.experimental.pallas import tpu as pltpu


# ----------------------------------------------------------------------------
# Pallas kernel: softmax + KL channels (vectorized) + LSTM recurrence + threshold
# ----------------------------------------------------------------------------
def _selector_kernel(cls1_ref, cls2_ref, aux_ref, dist_ref, gfin_ref,
                     params_ref, out_ref, *, margin):
    B, T, C = cls1_ref.shape            # T == idx + 1 real timesteps

    def softmax_logsoftmax(z):
        # z already contains the Gumbel noise (added in the wrapper).
        z = z - jnp.max(z, axis=-1, keepdims=True)
        e = jnp.exp(z)
        denom = jnp.sum(e, axis=-1, keepdims=True)          # [B, T, 1]
        # log-softmax trick: full-width log replaced by a log over [B, T, 1].
        return e / denom, z - jnp.log(denom)

    s1, _ = softmax_logsoftmax(cls1_ref[...])
    s2, ls2 = softmax_logsoftmax(cls2_ref[...])
    s3, _ = softmax_logsoftmax(aux_ref[...])
    s4, ls4 = softmax_logsoftmax(dist_ref[...])

    # KLDivLoss(reduction='none', log_target=False): tgt * (log(tgt) - input),
    # computed for every timestep in one pass (hoisted out of the recurrence).
    #   channel 0: input = softmax(cls1),   target = softmax(cls2)
    #   channel 1: input = softmax(cls_aux), target = softmax(distill_out)
    x0 = jnp.sum(s2 * (ls2 - s1), axis=-1)                  # [B, T]
    x1 = jnp.sum(s4 * (ls4 - s3), axis=-1)                  # [B, T]

    # LSTM parameters packed into one [7, 8] array (single tiny DMA):
    # rows 0-1: w_ih^T, rows 2-3: w_hh^T, row 4: b_ih + b_hh,
    # row 5: init_h (cols 0:2), row 6: init_c (cols 0:2).
    p = params_ref[...]
    w_ih0 = jnp.broadcast_to(p[0:1, :], (B, 8))             # broadcasts hoisted
    w_ih1 = jnp.broadcast_to(p[1:2, :], (B, 8))             # out of the loop
    w_hh0 = jnp.broadcast_to(p[2:3, :], (B, 8))
    w_hh1 = jnp.broadcast_to(p[3:4, :], (B, 8))
    bias = jnp.broadcast_to(p[4:5, :], (B, 8))
    h = jnp.broadcast_to(p[5:6, 0:2], (B, 2))
    c = jnp.broadcast_to(p[6:7, 0:2], (B, 2))

    # Serial recurrence over the idx+1 real timesteps (statically unrolled).
    # PyTorch gate order i,f,g,o: gates[:,0:2]=i, [:,2:4]=f, [:,4:6]=g, [:,6:8]=o.
    for t in range(T):
        gates = (x0[:, t:t + 1] * w_ih0 + x1[:, t:t + 1] * w_ih1
                 + h[:, 0:1] * w_hh0 + h[:, 1:2] * w_hh1 + bias)   # [B, 8]
        sg = jax.nn.sigmoid(gates)                           # one EUP pass
        th = jnp.tanh(gates)                                 # one EUP pass
        c = sg[:, 2:4] * c + sg[:, 0:2] * th[:, 4:6]         # f*c + i*g
        h = sg[:, 6:8] * jnp.tanh(c)                         # o*tanh(c)

    # gumbel_softmax on the LSTM output at timestep idx, channel 1,
    # ThresholdBinarizer(sigmoid=False): (x > margin).float()
    y = h + gfin_ref[...]                                    # [B, 2]
    y = y - jnp.max(y, axis=-1, keepdims=True)
    ey = jnp.exp(y)
    prob = ey / jnp.sum(ey, axis=-1, keepdims=True)
    out_ref[...] = (prob[:, 1:2] > margin).astype(jnp.float32)


# ----------------------------------------------------------------------------
# Wrapper: noise generation + one gridless pallas_call (no repacking of logits)
# ----------------------------------------------------------------------------
def pack_lstm_params(params):
    """Pack all LSTM parameters into one [7, 8] array (done once, not per call)."""
    w_ih_t = params["w_ih"].T.astype(jnp.float32)            # [2, 8]
    w_hh_t = params["w_hh"].T.astype(jnp.float32)            # [2, 8]
    bias = (params["b_ih"] + params["b_hh"]).reshape(1, 8).astype(jnp.float32)
    hc = jnp.zeros((2, 8), jnp.float32)
    hc = hc.at[0, 0:2].set(params["init_h"][0])
    hc = hc.at[1, 0:2].set(params["init_c"][0])
    return jnp.concatenate([w_ih_t, w_hh_t, bias, hc], axis=0)   # [7, 8]


@functools.partial(jax.jit, static_argnames=("n_state",))
def selector_forward(packed_params, cls1, cls2, cls_aux, distill_out, key, *,
                     n_state):
    B, T, C = cls1.shape                  # T == idx + 1 (as in the PyTorch caller)
    margin = 1.0 / float(n_state)

    # gumbel_softmax(x) == softmax(x + Gumbel(0,1)): fold the noise into the
    # logits here (one fused RNG+add per tensor, no extra kernel operands).
    k1, k2, k3, k4, k5 = jax.random.split(key, 5)
    cls1 = cls1.astype(jnp.float32) + jax.random.gumbel(k1, (B, T, C), jnp.float32)
    cls2 = cls2.astype(jnp.float32) + jax.random.gumbel(k2, (B, T, C), jnp.float32)
    cls_aux = cls_aux.astype(jnp.float32) + jax.random.gumbel(k3, (B, T, C), jnp.float32)
    distill_out = (distill_out.astype(jnp.float32)
                   + jax.random.gumbel(k4, (B, T, C), jnp.float32))
    g_final = jax.random.gumbel(k5, (B, 2), jnp.float32)

    kernel = functools.partial(_selector_kernel, margin=margin)
    vmem = pl.BlockSpec(memory_space=pltpu.MemorySpace.VMEM)

    mask = pl.pallas_call(
        kernel,
        out_shape=jax.ShapeDtypeStruct((B, 1), jnp.float32),
        in_specs=[vmem, vmem, vmem, vmem, vmem, vmem],
        out_specs=vmem,
    )(cls1, cls2, cls_aux, distill_out, g_final, packed_params)

    return mask[:, 0]                                        # .squeeze() -> [B]


# ----------------------------------------------------------------------------
# Deterministic parameter init (matches nn.LSTM(2,2,1) shapes, normal std=1e-3)
# ----------------------------------------------------------------------------
def init_params(key, hid_dim=2, input_size=2):
    kw1, kw2, kb1, kb2 = jax.random.split(key, 4)
    return {
        "w_ih": 0.001 * jax.random.normal(kw1, (4 * hid_dim, input_size), jnp.float32),
        "w_hh": 0.001 * jax.random.normal(kw2, (4 * hid_dim, hid_dim), jnp.float32),
        "b_ih": 0.001 * jax.random.normal(kb1, (4 * hid_dim,), jnp.float32),
        "b_hh": 0.001 * jax.random.normal(kb2, (4 * hid_dim,), jnp.float32),
        "init_h": jnp.zeros((1, hid_dim), jnp.float32),
        "init_c": jnp.zeros((1, hid_dim), jnp.float32),
    }


if __name__ == "__main__":
    B = 2            # batch
    C = 10           # num_class
    N_STATE = 8      # args.n_estimators
    IDX = 3          # current exit index -> cls tensors have seq length idx+1

    root = jax.random.PRNGKey(0)
    k_params, kx1, kx2, kx3, kx4, k_noise = jax.random.split(root, 6)

    params = init_params(k_params)
    packed_params = pack_lstm_params(params)

    cls1 = jax.random.normal(kx1, (B, IDX + 1, C), jnp.float32)
    cls2 = jax.random.normal(kx2, (B, IDX + 1, C), jnp.float32)
    cls_aux = jax.random.normal(kx3, (B, IDX + 1, C), jnp.float32)
    distill_out = jax.random.normal(kx4, (B, IDX + 1, C), jnp.float32)

    out = selector_forward(packed_params, cls1, cls2, cls_aux, distill_out,
                           k_noise, n_state=N_STATE)
    out = jax.block_until_ready(out)
    assert out.shape == (B,)
    print("KERNEL_OK")
</pallas_src>

<mosaic_0001>
module attributes {stable_mosaic.version = 11 : i64} {
  func.func @_selector_kernel(%arg0: memref<2x4x10xf32, #tpu.memory_space<vmem>>, %arg1: memref<2x4x10xf32, #tpu.memory_space<vmem>>, %arg2: memref<2x4x10xf32, #tpu.memory_space<vmem>>, %arg3: memref<2x4x10xf32, #tpu.memory_space<vmem>>, %arg4: memref<2x2xf32, #tpu.memory_space<vmem>>, %arg5: memref<7x8xf32, #tpu.memory_space<vmem>>, %arg6: memref<2x1xf32, #tpu.memory_space<vmem>>) attributes {dimension_semantics = [], scalar_prefetch = 0 : i64, scratch_operands = 0 : i64, tpu.core_type = #tpu.core_type<tc>} {
    %c0 = arith.constant 0 : index
    %c0_0 = arith.constant 0 : index
    %c0_1 = arith.constant 0 : index
    %0 = vector.load %arg0[%c0, %c0_0, %c0_1] : memref<2x4x10xf32, #tpu.memory_space<vmem>>, vector<2x4x10xf32>
    %cst = arith.constant dense<0xFF800000> : vector<2x4xf32>
    %1 = vector.multi_reduction <maximumf>, %0, %cst [2] : vector<2x4x10xf32> to vector<2x4xf32>
    %2 = vector.shape_cast %1 : vector<2x4xf32> to vector<2x4x1xf32>
    %3 = vector.broadcast %2 : vector<2x4x1xf32> to vector<2x4x10xf32>
    %4 = arith.subf %0, %3 : vector<2x4x10xf32>
    %5 = math.exp %4 : vector<2x4x10xf32>
    %cst_2 = arith.constant dense<0.000000e+00> : vector<2x4xf32>
    %6 = vector.multi_reduction <add>, %5, %cst_2 [2] : vector<2x4x10xf32> to vector<2x4xf32>
    %7 = vector.shape_cast %6 : vector<2x4xf32> to vector<2x4x1xf32>
    %8 = vector.broadcast %7 : vector<2x4x1xf32> to vector<2x4x10xf32>
    %9 = arith.divf %5, %8 : vector<2x4x10xf32>
    %c0_3 = arith.constant 0 : index
    %c0_4 = arith.constant 0 : index
    %c0_5 = arith.constant 0 : index
    %10 = vector.load %arg1[%c0_3, %c0_4, %c0_5] : memref<2x4x10xf32, #tpu.memory_space<vmem>>, vector<2x4x10xf32>
    %cst_6 = arith.constant dense<0xFF800000> : vector<2x4xf32>
    %11 = vector.multi_reduction <maximumf>, %10, %cst_6 [2] : vector<2x4x10xf32> to vector<2x4xf32>
    %12 = vector.shape_cast %11 : vector<2x4xf32> to vector<2x4x1xf32>
    %13 = vector.broadcast %12 : vector<2x4x1xf32> to vector<2x4x10xf32>
    %14 = arith.subf %10, %13 : vector<2x4x10xf32>
    %15 = math.exp %14 : vector<2x4x10xf32>
    %cst_7 = arith.constant dense<0.000000e+00> : vector<2x4xf32>
    %16 = vector.multi_reduction <add>, %15, %cst_7 [2] : vector<2x4x10xf32> to vector<2x4xf32>
    %17 = vector.shape_cast %16 : vector<2x4xf32> to vector<2x4x1xf32>
    %18 = vector.broadcast %17 : vector<2x4x1xf32> to vector<2x4x10xf32>
    %19 = arith.divf %15, %18 : vector<2x4x10xf32>
    %20 = math.log %17 : vector<2x4x1xf32>
    %21 = vector.broadcast %20 : vector<2x4x1xf32> to vector<2x4x10xf32>
    %22 = arith.subf %14, %21 : vector<2x4x10xf32>
    %c0_8 = arith.constant 0 : index
    %c0_9 = arith.constant 0 : index
    %c0_10 = arith.constant 0 : index
    %23 = vector.load %arg2[%c0_8, %c0_9, %c0_10] : memref<2x4x10xf32, #tpu.memory_space<vmem>>, vector<2x4x10xf32>
    %cst_11 = arith.constant dense<0xFF800000> : vector<2x4xf32>
    %24 = vector.multi_reduction <maximumf>, %23, %cst_11 [2] : vector<2x4x10xf32> to vector<2x4xf32>
    %25 = vector.shape_cast %24 : vector<2x4xf32> to vector<2x4x1xf32>
    %26 = vector.broadcast %25 : vector<2x4x1xf32> to vector<2x4x10xf32>
    %27 = arith.subf %23, %26 : vector<2x4x10xf32>
    %28 = math.exp %27 : vector<2x4x10xf32>
    %cst_12 = arith.constant dense<0.000000e+00> : vector<2x4xf32>
    %29 = vector.multi_reduction <add>, %28, %cst_12 [2] : vector<2x4x10xf32> to vector<2x4xf32>
    %30 = vector.shape_cast %29 : vector<2x4xf32> to vector<2x4x1xf32>
    %31 = vector.broadcast %30 : vector<2x4x1xf32> to vector<2x4x10xf32>
    %32 = arith.divf %28, %31 : vector<2x4x10xf32>
    %c0_13 = arith.constant 0 : index
    %c0_14 = arith.constant 0 : index
    %c0_15 = arith.constant 0 : index
    %33 = vector.load %arg3[%c0_13, %c0_14, %c0_15] : memref<2x4x10xf32, #tpu.memory_space<vmem>>, vector<2x4x10xf32>
    %cst_16 = arith.constant dense<0xFF800000> : vector<2x4xf32>
    %34 = vector.multi_reduction <maximumf>, %33, %cst_16 [2] : vector<2x4x10xf32> to vector<2x4xf32>
    %35 = vector.shape_cast %34 : vector<2x4xf32> to vector<2x4x1xf32>
    %36 = vector.broadcast %35 : vector<2x4x1xf32> to vector<2x4x10xf32>
    %37 = arith.subf %33, %36 : vector<2x4x10xf32>
    %38 = math.exp %37 : vector<2x4x10xf32>
    %cst_17 = arith.constant dense<0.000000e+00> : vector<2x4xf32>
    %39 = vector.multi_reduction <add>, %38, %cst_17 [2] : vector<2x4x10xf32> to vector<2x4xf32>
    %40 = vector.shape_cast %39 : vector<2x4xf32> to vector<2x4x1xf32>
    %41 = vector.broadcast %40 : vector<2x4x1xf32> to vector<2x4x10xf32>
    %42 = arith.divf %38, %41 : vector<2x4x10xf32>
    %43 = math.log %40 : vector<2x4x1xf32>
    %44 = vector.broadcast %43 : vector<2x4x1xf32> to vector<2x4x10xf32>
    %45 = arith.subf %37, %44 : vector<2x4x10xf32>
    %46 = arith.subf %22, %9 : vector<2x4x10xf32>
    %47 = arith.mulf %19, %46 : vector<2x4x10xf32>
    %cst_18 = arith.constant dense<0.000000e+00> : vector<2x4xf32>
    %48 = vector.multi_reduction <add>, %47, %cst_18 [2] : vector<2x4x10xf32> to vector<2x4xf32>
    %49 = arith.subf %45, %32 : vector<2x4x10xf32>
    %50 = arith.mulf %42, %49 : vector<2x4x10xf32>
    %cst_19 = arith.constant dense<0.000000e+00> : vector<2x4xf32>
    %51 = vector.multi_reduction <add>, %50, %cst_19 [2] : vector<2x4x10xf32> to vector<2x4xf32>
    %c0_20 = arith.constant 0 : index
    %c0_21 = arith.constant 0 : index
    %52 = vector.load %arg5[%c0_20, %c0_21] : memref<7x8xf32, #tpu.memory_space<vmem>>, vector<7x8xf32>
    %53 = vector.extract_strided_slice %52 {offsets = [0, 0], sizes = [1, 8], strides = [1, 1]} : vector<7x8xf32> to vector<1x8xf32>
    %54 = vector.shape_cast %53 : vector<1x8xf32> to vector<1x8xf32>
    %55 = vector.broadcast %54 : vector<1x8xf32> to vector<2x8xf32>
    %56 = vector.extract_strided_slice %52 {offsets = [1, 0], sizes = [1, 8], strides = [1, 1]} : vector<7x8xf32> to vector<1x8xf32>
    %57 = vector.shape_cast %56 : vector<1x8xf32> to vector<1x8xf32>
    %58 = vector.broadcast %57 : vector<1x8xf32> to vector<2x8xf32>
    %59 = vector.extract_strided_slice %52 {offsets = [2, 0], sizes = [1, 8], strides = [1, 1]} : vector<7x8xf32> to vector<1x8xf32>
    %60 = vector.shape_cast %59 : vector<1x8xf32> to vector<1x8xf32>
    %61 = vector.broadcast %60 : vector<1x8xf32> to vector<2x8xf32>
    %62 = vector.extract_strided_slice %52 {offsets = [3, 0], sizes = [1, 8], strides = [1, 1]} : vector<7x8xf32> to vector<1x8xf32>
    %63 = vector.shape_cast %62 : vector<1x8xf32> to vector<1x8xf32>
    %64 = vector.broadcast %63 : vector<1x8xf32> to vector<2x8xf32>
    %65 = vector.extract_strided_slice %52 {offsets = [4, 0], sizes = [1, 8], strides = [1, 1]} : vector<7x8xf32> to vector<1x8xf32>
    %66 = vector.shape_cast %65 : vector<1x8xf32> to vector<1x8xf32>
    %67 = vector.broadcast %66 : vector<1x8xf32> to vector<2x8xf32>
    %68 = vector.extract_strided_slice %52 {offsets = [5, 0], sizes = [1, 2], strides = [1, 1]} : vector<7x8xf32> to vector<1x2xf32>
    %69 = vector.shape_cast %68 : vector<1x2xf32> to vector<1x2xf32>
    %70 = vector.broadcast %69 : vector<1x2xf32> to vector<2x2xf32>
    %71 = vector.extract_strided_slice %52 {offsets = [6, 0], sizes = [1, 2], strides = [1, 1]} : vector<7x8xf32> to vector<1x2xf32>
    %72 = vector.shape_cast %71 : vector<1x2xf32> to vector<1x2xf32>
    %73 = vector.broadcast %72 : vector<1x2xf32> to vector<2x2xf32>
    %74 = vector.extract_strided_slice %48 {offsets = [0, 0], sizes = [2, 1], strides = [1, 1]} : vector<2x4xf32> to vector<2x1xf32>
    %75 = vector.broadcast %74 : vector<2x1xf32> to vector<2x8xf32>
    %76 = arith.mulf %75, %55 : vector<2x8xf32>
    %77 = vector.extract_strided_slice %51 {offsets = [0, 0], sizes = [2, 1], strides = [1, 1]} : vector<2x4xf32> to vector<2x1xf32>
    %78 = vector.broadcast %77 : vector<2x1xf32> to vector<2x8xf32>
    %79 = arith.mulf %78, %58 : vector<2x8xf32>
    %80 = arith.addf %76, %79 : vector<2x8xf32>
    %81 = vector.extract_strided_slice %70 {offsets = [0, 0], sizes = [2, 1], strides = [1, 1]} : vector<2x2xf32> to vector<2x1xf32>
    %82 = vector.broadcast %81 : vector<2x1xf32> to vector<2x8xf32>
    %83 = arith.mulf %82, %61 : vector<2x8xf32>
    %84 = arith.addf %80, %83 : vector<2x8xf32>
    %85 = vector.extract_strided_slice %70 {offsets = [0, 1], sizes = [2, 1], strides = [1, 1]} : vector<2x2xf32> to vector<2x1xf32>
    %86 = vector.broadcast %85 : vector<2x1xf32> to vector<2x8xf32>
    %87 = arith.mulf %86, %64 : vector<2x8xf32>
    %88 = arith.addf %84, %87 : vector<2x8xf32>
    %89 = arith.addf %88, %67 : vector<2x8xf32>
    %90 = arith.negf %89 : vector<2x8xf32>
    %91 = math.exp %90 : vector<2x8xf32>
    %cst_22 = arith.constant 1.000000e+00 : f32
    %92 = vector.broadcast %cst_22 : f32 to vector<2x8xf32>
    %93 = arith.addf %92, %91 : vector<2x8xf32>
    %94 = arith.divf %92, %93 : vector<2x8xf32>
    %95 = math.tanh %89 : vector<2x8xf32>
    %96 = vector.extract_strided_slice %94 {offsets = [0, 2], sizes = [2, 2], strides = [1, 1]} : vector<2x8xf32> to vector<2x2xf32>
    %97 = arith.mulf %96, %73 : vector<2x2xf32>
    %98 = vector.extract_strided_slice %94 {offsets = [0, 0], sizes = [2, 2], strides = [1, 1]} : vector<2x8xf32> to vector<2x2xf32>
    %99 = vector.extract_strided_slice %95 {offsets = [0, 4], sizes = [2, 2], strides = [1, 1]} : vector<2x8xf32> to vector<2x2xf32>
    %100 = arith.mulf %98, %99 : vector<2x2xf32>
    %101 = arith.addf %97, %100 : vector<2x2xf32>
    %102 = vector.extract_strided_slice %94 {offsets = [0, 6], sizes = [2, 2], strides = [1, 1]} : vector<2x8xf32> to vector<2x2xf32>
    %103 = math.tanh %101 : vector<2x2xf32>
    %104 = arith.mulf %102, %103 : vector<2x2xf32>
    %105 = vector.extract_strided_slice %48 {offsets = [0, 1], sizes = [2, 1], strides = [1, 1]} : vector<2x4xf32> to vector<2x1xf32>
    %106 = vector.broadcast %105 : vector<2x1xf32> to vector<2x8xf32>
    %107 = arith.mulf %106, %55 : vector<2x8xf32>
    %108 = vector.extract_strided_slice %51 {offsets = [0, 1], sizes = [2, 1], strides = [1, 1]} : vector<2x4xf32> to vector<2x1xf32>
    %109 = vector.broadcast %108 : vector<2x1xf32> to vector<2x8xf32>
    %110 = arith.mulf %109, %58 : vector<2x8xf32>
    %111 = arith.addf %107, %110 : vector<2x8xf32>
    %112 = vector.extract_strided_slice %104 {offsets = [0, 0], sizes = [2, 1], strides = [1, 1]} : vector<2x2xf32> to vector<2x1xf32>
    %113 = vector.broadcast %112 : vector<2x1xf32> to vector<2x8xf32>
    %114 = arith.mulf %113, %61 : vector<2x8xf32>
    %115 = arith.addf %111, %114 : vector<2x8xf32>
    %116 = vector.extract_strided_slice %104 {offsets = [0, 1], sizes = [2, 1], strides = [1, 1]} : vector<2x2xf32> to vector<2x1xf32>
    %117 = vector.broadcast %116 : vector<2x1xf32> to vector<2x8xf32>
    %118 = arith.mulf %117, %64 : vector<2x8xf32>
    %119 = arith.addf %115, %118 : vector<2x8xf32>
    %120 = arith.addf %119, %67 : vector<2x8xf32>
    %121 = arith.negf %120 : vector<2x8xf32>
    %122 = math.exp %121 : vector<2x8xf32>
    %cst_23 = arith.constant 1.000000e+00 : f32
    %123 = vector.broadcast %cst_23 : f32 to vector<2x8xf32>
    %124 = arith.addf %123, %122 : vector<2x8xf32>
    %125 = arith.divf %123, %124 : vector<2x8xf32>
    %126 = math.tanh %120 : vector<2x8xf32>
    %127 = vector.extract_strided_slice %125 {offsets = [0, 2], sizes = [2, 2], strides = [1, 1]} : vector<2x8xf32> to vector<2x2xf32>
    %128 = arith.mulf %127, %101 : vector<2x2xf32>
    %129 = vector.extract_strided_slice %125 {offsets = [0, 0], sizes = [2, 2], strides = [1, 1]} : vector<2x8xf32> to vector<2x2xf32>
    %130 = vector.extract_strided_slice %126 {offsets = [0, 4], sizes = [2, 2], strides = [1, 1]} : vector<2x8xf32> to vector<2x2xf32>
    %131 = arith.mulf %129, %130 : vector<2x2xf32>
    %132 = arith.addf %128, %131 : vector<2x2xf32>
    %133 = vector.extract_strided_slice %125 {offsets = [0, 6], sizes = [2, 2], strides = [1, 1]} : vector<2x8xf32> to vector<2x2xf32>
    %134 = math.tanh %132 : vector<2x2xf32>
    %135 = arith.mulf %133, %134 : vector<2x2xf32>
    %136 = vector.extract_strided_slice %48 {offsets = [0, 2], sizes = [2, 1], strides = [1, 1]} : vector<2x4xf32> to vector<2x1xf32>
    %137 = vector.broadcast %136 : vector<2x1xf32> to vector<2x8xf32>
    %138 = arith.mulf %137, %55 : vector<2x8xf32>
    %139 = vector.extract_strided_slice %51 {offsets = [0, 2], sizes = [2, 1], strides = [1, 1]} : vector<2x4xf32> to vector<2x1xf32>
    %140 = vector.broadcast %139 : vector<2x1xf32> to vector<2x8xf32>
    %141 = arith.mulf %140, %58 : vector<2x8xf32>
    %142 = arith.addf %138, %141 : vector<2x8xf32>
    %143 = vector.extract_strided_slice %135 {offsets = [0, 0], sizes = [2, 1], strides = [1, 1]} : vector<2x2xf32> to vector<2x1xf32>
    %144 = vector.broadcast %143 : vector<2x1xf32> to vector<2x8xf32>
    %145 = arith.mulf %144, %61 : vector<2x8xf32>
    %146 = arith.addf %142, %145 : vector<2x8xf32>
    %147 = vector.extract_strided_slice %135 {offsets = [0, 1], sizes = [2, 1], strides = [1, 1]} : vector<2x2xf32> to vector<2x1xf32>
    %148 = vector.broadcast %147 : vector<2x1xf32> to vector<2x8xf32>
    %149 = arith.mulf %148, %64 : vector<2x8xf32>
    %150 = arith.addf %146, %149 : vector<2x8xf32>
    %151 = arith.addf %150, %67 : vector<2x8xf32>
    %152 = arith.negf %151 : vector<2x8xf32>
    %153 = math.exp %152 : vector<2x8xf32>
    %cst_24 = arith.constant 1.000000e+00 : f32
    %154 = vector.broadcast %cst_24 : f32 to vector<2x8xf32>
    %155 = arith.addf %154, %153 : vector<2x8xf32>
    %156 = arith.divf %154, %155 : vector<2x8xf32>
    %157 = math.tanh %151 : vector<2x8xf32>
    %158 = vector.extract_strided_slice %156 {offsets = [0, 2], sizes = [2, 2], strides = [1, 1]} : vector<2x8xf32> to vector<2x2xf32>
    %159 = arith.mulf %158, %132 : vector<2x2xf32>
    %160 = vector.extract_strided_slice %156 {offsets = [0, 0], sizes = [2, 2], strides = [1, 1]} : vector<2x8xf32> to vector<2x2xf32>
    %161 = vector.extract_strided_slice %157 {offsets = [0, 4], sizes = [2, 2], strides = [1, 1]} : vector<2x8xf32> to vector<2x2xf32>
    %162 = arith.mulf %160, %161 : vector<2x2xf32>
    %163 = arith.addf %159, %162 : vector<2x2xf32>
    %164 = vector.extract_strided_slice %156 {offsets = [0, 6], sizes = [2, 2], strides = [1, 1]} : vector<2x8xf32> to vector<2x2xf32>
    %165 = math.tanh %163 : vector<2x2xf32>
    %166 = arith.mulf %164, %165 : vector<2x2xf32>
    %167 = vector.extract_strided_slice %48 {offsets = [0, 3], sizes = [2, 1], strides = [1, 1]} : vector<2x4xf32> to vector<2x1xf32>
    %168 = vector.broadcast %167 : vector<2x1xf32> to vector<2x8xf32>
    %169 = arith.mulf %168, %55 : vector<2x8xf32>
    %170 = vector.extract_strided_slice %51 {offsets = [0, 3], sizes = [2, 1], strides = [1, 1]} : vector<2x4xf32> to vector<2x1xf32>
    %171 = vector.broadcast %170 : vector<2x1xf32> to vector<2x8xf32>
    %172 = arith.mulf %171, %58 : vector<2x8xf32>
    %173 = arith.addf %169, %172 : vector<2x8xf32>
    %174 = vector.extract_strided_slice %166 {offsets = [0, 0], sizes = [2, 1], strides = [1, 1]} : vector<2x2xf32> to vector<2x1xf32>
    %175 = vector.broadcast %174 : vector<2x1xf32> to vector<2x8xf32>
    %176 = arith.mulf %175, %61 : vector<2x8xf32>
    %177 = arith.addf %173, %176 : vector<2x8xf32>
    %178 = vector.extract_strided_slice %166 {offsets = [0, 1], sizes = [2, 1], strides = [1, 1]} : vector<2x2xf32> to vector<2x1xf32>
    %179 = vector.broadcast %178 : vector<2x1xf32> to vector<2x8xf32>
    %180 = arith.mulf %179, %64 : vector<2x8xf32>
    %181 = arith.addf %177, %180 : vector<2x8xf32>
    %182 = arith.addf %181, %67 : vector<2x8xf32>
    %183 = arith.negf %182 : vector<2x8xf32>
    %184 = math.exp %183 : vector<2x8xf32>
    %cst_25 = arith.constant 1.000000e+00 : f32
    %185 = vector.broadcast %cst_25 : f32 to vector<2x8xf32>
    %186 = arith.addf %185, %184 : vector<2x8xf32>
    %187 = arith.divf %185, %186 : vector<2x8xf32>
    %188 = math.tanh %182 : vector<2x8xf32>
    %189 = vector.extract_strided_slice %187 {offsets = [0, 2], sizes = [2, 2], strides = [1, 1]} : vector<2x8xf32> to vector<2x2xf32>
    %190 = arith.mulf %189, %163 : vector<2x2xf32>
    %191 = vector.extract_strided_slice %187 {offsets = [0, 0], sizes = [2, 2], strides = [1, 1]} : vector<2x8xf32> to vector<2x2xf32>
    %192 = vector.extract_strided_slice %188 {offsets = [0, 4], sizes = [2, 2], strides = [1, 1]} : vector<2x8xf32> to vector<2x2xf32>
    %193 = arith.mulf %191, %192 : vector<2x2xf32>
    %194 = arith.addf %190, %193 : vector<2x2xf32>
    %195 = vector.extract_strided_slice %187 {offsets = [0, 6], sizes = [2, 2], strides = [1, 1]} : vector<2x8xf32> to vector<2x2xf32>
    %196 = math.tanh %194 : vector<2x2xf32>
    %197 = arith.mulf %195, %196 : vector<2x2xf32>
    %c0_26 = arith.constant 0 : index
    %c0_27 = arith.constant 0 : index
    %198 = vector.load %arg4[%c0_26, %c0_27] : memref<2x2xf32, #tpu.memory_space<vmem>>, vector<2x2xf32>
    %199 = arith.addf %197, %198 : vector<2x2xf32>
    %cst_28 = arith.constant dense<0xFF800000> : vector<2xf32>
    %200 = vector.multi_reduction <maximumf>, %199, %cst_28 [1] : vector<2x2xf32> to vector<2xf32>
    %201 = vector.shape_cast %200 : vector<2xf32> to vector<2x1xf32>
    %202 = vector.broadcast %201 : vector<2x1xf32> to vector<2x2xf32>
    %203 = arith.subf %199, %202 : vector<2x2xf32>
    %204 = math.exp %203 : vector<2x2xf32>
    %cst_29 = arith.constant dense<0.000000e+00> : vector<2xf32>
    %205 = vector.multi_reduction <add>, %204, %cst_29 [1] : vector<2x2xf32> to vector<2xf32>
    %206 = vector.shape_cast %205 : vector<2xf32> to vector<2x1xf32>
    %207 = vector.broadcast %206 : vector<2x1xf32> to vector<2x2xf32>
    %208 = arith.divf %204, %207 : vector<2x2xf32>
    %209 = vector.extract_strided_slice %208 {offsets = [0, 1], sizes = [2, 1], strides = [1, 1]} : vector<2x2xf32> to vector<2x1xf32>
    %cst_30 = arith.constant 1.250000e-01 : f32
    %210 = vector.broadcast %cst_30 : f32 to vector<2x1xf32>
    %211 = arith.cmpf ogt, %209, %210 : vector<2x1xf32>
    %212 = arith.extui %211 : vector<2x1xi1> to vector<2x1xi32>
    %213 = arith.sitofp %212 : vector<2x1xi32> to vector<2x1xf32>
    %c0_31 = arith.constant 0 : index
    %c0_32 = arith.constant 0 : index
    %214 = vector.load %arg6[%c0_31, %c0_32] : memref<2x1xf32, #tpu.memory_space<vmem>>, vector<2x1xf32>
    tpu.vector_store %arg6[%c0_31, %c0_32], %213 {strides = array<i32>} : memref<2x1xf32, #tpu.memory_space<vmem>>, vector<2x1xf32>,
    return
  }
}

</mosaic_0001>

<llo_original>
// kernel: selector_forward.3
$region0: #{selector_forward.3}
  #allocation0 [shape = 'u32[]', space=smem, size = 0x4, offset = 0x4, fixed_abs, tag = 'smem constant byte address 0x4 - core index']
  #allocation1 [shape = 'u32[144,128]{1,0:T(1,128)}', space=vmem, size = 0x12000, scoped, tag = 'internal scratch']
  %s0 = inlined_call_operand.vmem [shape: f32[2,4,10], index: 0, kind: input, shape index: {}]
  %s1 = inlined_call_operand.vmem [shape: f32[2,4,10], index: 1, kind: input, shape index: {}]
  %s2 = inlined_call_operand.vmem [shape: f32[2,4,10], index: 2, kind: input, shape index: {}]
  %s3 = inlined_call_operand.vmem [shape: f32[2,4,10], index: 3, kind: input, shape index: {}]
  %s4 = inlined_call_operand.vmem [shape: f32[2,2], index: 4, kind: input, shape index: {}]
  %s5 = inlined_call_operand.vmem [shape: f32[7,8], index: 5, kind: input, shape index: {}]
  %s6 = inlined_call_operand.vmem [shape: f32[2,1], index: 6, kind: output, shape index: {}]
  %s7 = sld [smem:[#allocation0]]
  $region34: #{selector_forward.3} parent=0
    _
  %s9 = ssub.s32 1, %s7
  %s10 = scalar_select 0, %s9, %s7
  // Predicated region
  $region2: #{selector_forward.3} parent=0 // pred_check
    _
  $region3: #{selector_forward.3} parent=0 // pred_check_branch
    %12 = sbr.rel (0) target = $region5
  $region4: #{selector_forward.3} parent=0 // pred_region
    _
  $region5: #{selector_forward.3} parent=0 // pred_fallthru
    _
  // Predicated region
  $region6: #{selector_forward.3} parent=0 // pred_check
    _
  $region7: #{selector_forward.3} parent=0 // pred_check_branch
    %14 = sbr.rel (0) target = $region9
  $region8: #{selector_forward.3} parent=0 // pred_region
    _
  $region9: #{selector_forward.3} parent=0 // pred_fallthru
    _
  // Predicated region
  $region10: #{selector_forward.3} parent=0 // pred_check
    _
  $region11: #{selector_forward.3} parent=0 // pred_check_branch
    %16 = sbr.rel (0) target = $region13
  $region12: #{selector_forward.3} parent=0 // pred_region
    _
  $region13: #{selector_forward.3} parent=0 // pred_fallthru
    _
  // Predicated region
  $region14: #{selector_forward.3} parent=0 // pred_check
    _
  $region15: #{selector_forward.3} parent=0 // pred_check_branch
    %18 = sbr.rel (0) target = $region17
  $region16: #{selector_forward.3} parent=0 // pred_region
    _
  $region17: #{selector_forward.3} parent=0 // pred_fallthru
    _
  // Predicated region
  $region18: #{selector_forward.3} parent=0 // pred_check
    _
  $region19: #{selector_forward.3} parent=0 // pred_check_branch
    %20 = sbr.rel (0) target = $region21
  $region20: #{selector_forward.3} parent=0 // pred_region
    _
  $region21: #{selector_forward.3} parent=0 // pred_fallthru
    _
  // Predicated region
  $region22: #{selector_forward.3} parent=0 // pred_check
    _
  $region23: #{selector_forward.3} parent=0 // pred_check_branch
    %22 = sbr.rel (0) target = $region25
  $region24: #{selector_forward.3} parent=0 // pred_region
    _
  $region25: #{selector_forward.3} parent=0 // pred_fallthru
    _
  %v23 = vld [vmem:[%s0] sm:$0xf]
  %v24 = vld [vmem:[%s0 + $0x4] sm:$0xf]
  %vm25 = vcmask 76800
  %v26 = vsel %vm25, %v23, -inf
  %27 = vmax.xlane.f32.xlu0 %v26
  %v28 = vpop.xlane.xlu0 %27
  %v29 = vsel %vm25, %v24, -inf
  %30 = vmax.xlane.f32.xlu0 %v29
  %v31 = vpop.xlane.xlu0 %30
  %v32 = vsub.f32 %v23, %v28
  %v33 = vsub.f32 %v24, %v31
  %v34 = vmul.f32 %v32, 1.442695
  %v35 = vpow.pop %v34
  %v36 = vmul.f32 %v33, 1.442695
  %v37 = vpow.pop %v36
  %v38 = vsel %vm25, %v35, 0.0
  %39 = vadd.xlane.f32.xlu0 %v38
  %v40 = vpop.xlane.xlu0 %39
  %v41 = vsel %vm25, %v37, 0.0
  %42 = vadd.xlane.f32.xlu0 %v41
  %v43 = vpop.xlane.xlu0 %42
  %v44 = vrcp.pop %v40
  %v45 = vmul.f32 %v35, %v44
  %v46 = vrcp.pop %v43
  %v47 = vmul.f32 %v37, %v46
  %v48 = vld [vmem:[%s1] sm:$0xf]
  %v49 = vld [vmem:[%s1 + $0x4] sm:$0xf]
  %v50 = vsel %vm25, %v48, -inf
  %51 = vmax.xlane.f32.xlu0 %v50
  %v52 = vpop.xlane.xlu0 %51
  %v53 = vsel %vm25, %v49, -inf
  %54 = vmax.xlane.f32.xlu0 %v53
  %v55 = vpop.xlane.xlu0 %54
  %v56 = vsub.f32 %v48, %v52
  %v57 = vsub.f32 %v49, %v55
  %v58 = vmul.f32 %v56, 1.442695
  %v59 = vpow.pop %v58
  %v60 = vmul.f32 %v57, 1.442695
  %v61 = vpow.pop %v60
  %v62 = vsel %vm25, %v59, 0.0
  %63 = vadd.xlane.f32.xlu0 %v62
  %v64 = vpop.xlane.xlu0 %63
  %v65 = vsel %vm25, %v61, 0.0
  %66 = vadd.xlane.f32.xlu0 %v65
  %v67 = vpop.xlane.xlu0 %66
  %v68 = vrcp.pop %v64
  %v69 = vmul.f32 %v59, %v68
  %v70 = vrcp.pop %v67
  %v71 = vmul.f32 %v61, %v70
  %v72 = vlog2.pop %v64
  %v73 = vmul.f32 %v72, 0.6931472
  %v74 = vlog2.pop %v67
  %v75 = vmul.f32 %v74, 0.6931472
  %v76 = vsub.f32 %v56, %v73
  %v77 = vsub.f32 %v57, %v75
  %v78 = vld [vmem:[%s2] sm:$0xf]
  %v79 = vld [vmem:[%s2 + $0x4] sm:$0xf]
  %v80 = vsel %vm25, %v78, -inf
  %81 = vmax.xlane.f32.xlu0 %v80
  %v82 = vpop.xlane.xlu0 %81
  %v83 = vsel %vm25, %v79, -inf
  %84 = vmax.xlane.f32.xlu0 %v83
  %v85 = vpop.xlane.xlu0 %84
  %v86 = vsub.f32 %v78, %v82
  %v87 = vsub.f32 %v79, %v85
  %v88 = vmul.f32 %v86, 1.442695
  %v89 = vpow.pop %v88
  %v90 = vmul.f32 %v87, 1.442695
  %v91 = vpow.pop %v90
  %v92 = vsel %vm25, %v89, 0.0
  %93 = vadd.xlane.f32.xlu0 %v92
  %v94 = vpop.xlane.xlu0 %93
  %v95 = vsel %vm25, %v91, 0.0
  %96 = vadd.xlane.f32.xlu0 %v95
  %v97 = vpop.xlane.xlu0 %96
  %v98 = vrcp.pop %v94
  %v99 = vmul.f32 %v89, %v98
  %v100 = vrcp.pop %v97
  %v101 = vmul.f32 %v91, %v100
  %v102 = vld [vmem:[%s3] sm:$0xf]
  %v103 = vld [vmem:[%s3 + $0x4] sm:$0xf]
  %v104 = vsel %vm25, %v102, -inf
  %105 = vmax.xlane.f32.xlu0 %v104
  %v106 = vpop.xlane.xlu0 %105
  %v107 = vsel %vm25, %v103, -inf
  %108 = vmax.xlane.f32.xlu0 %v107
  %v109 = vpop.xlane.xlu0 %108
  %v110 = vsub.f32 %v102, %v106
  %v111 = vsub.f32 %v103, %v109
  %v112 = vmul.f32 %v110, 1.442695
  %v113 = vpow.pop %v112
  %v114 = vmul.f32 %v111, 1.442695
  %v115 = vpow.pop %v114
  %v116 = vsel %vm25, %v113, 0.0
  %117 = vadd.xlane.f32.xlu0 %v116
  %v118 = vpop.xlane.xlu0 %117
  %v119 = vsel %vm25, %v115, 0.0
  %120 = vadd.xlane.f32.xlu0 %v119
  %v121 = vpop.xlane.xlu0 %120
  %v122 = vrcp.pop %v118
  %v123 = vmul.f32 %v113, %v122
  %v124 = vrcp.pop %v121
  %v125 = vmul.f32 %v115, %v124
  %v126 = vlog2.pop %v118
  %v127 = vmul.f32 %v126, 0.6931472
  %v128 = vlog2.pop %v121
  %v129 = vmul.f32 %v128, 0.6931472
  %v130 = vsub.f32 %v110, %v127
  %v131 = vsub.f32 %v111, %v129
  %v132 = vsub.f32 %v76, %v45
  %v133 = vsub.f32 %v77, %v47
  %v134 = vmul.f32 %v69, %v132
  %v135 = vmul.f32 %v71, %v133
  %v136 = vsel %vm25, %v134, 0.0
  %137 = vadd.xlane.f32.xlu0 %v136
  %v138 = vpop.xlane.xlu0 %137
  %v139 = vsel %vm25, %v135, 0.0
  %140 = vadd.xlane.f32.xlu0 %v139
  %v141 = vpop.xlane.xlu0 %140
  %v142 = vsub.f32 %v130, %v99
  %v143 = vsub.f32 %v131, %v101
  %v144 = vmul.f32 %v123, %v142
  %v145 = vmul.f32 %v125, %v143
  %v146 = vsel %vm25, %v144, 0.0
  %147 = vadd.xlane.f32.xlu0 %v146
  %v148 = vpop.xlane.xlu0 %147
  %v149 = vsel %vm25, %v145, 0.0
  %150 = vadd.xlane.f32.xlu0 %v149
  %v151 = vpop.xlane.xlu0 %150
  %v152 = vld [vmem:[%s5] sm:$0x7f]
  %v153 = vlaneseq
  %v154 = vshrl.u32 %v153, 7
  %v155 = vsub.s32 0, %v154
  %v156 = vrot.slane %v152, %v155
  %v157 = vlaneseq
  %v158 = vshrl.u32 %v157, 7
  %v159 = vsub.s32 1, %v158
  %v160 = vrot.slane %v152, %v159
  %v161 = vlaneseq
  %v162 = vshrl.u32 %v161, 7
  %v163 = vsub.s32 2, %v162
  %v164 = vrot.slane %v152, %v163
  %v165 = vlaneseq
  %v166 = vshrl.u32 %v165, 7
  %v167 = vsub.s32 3, %v166
  %v168 = vrot.slane %v152, %v167
  %v169 = vlaneseq
  %v170 = vshrl.u32 %v169, 7
  %v171 = vsub.s32 4, %v170
  %v172 = vrot.slane %v152, %v171
  %v173 = vlaneseq
  %v174 = vshrl.u32 %v173, 7
  %v175 = vsub.s32 6, %v174
  %v176 = vrot.slane %v152, %v175
  %v177 = vlaneseq
  %v178 = vshrl.u32 %v177, 7
  %v179 = vsub.s32 0, %v178
  %v180 = vrot.slane %v138, %v179
  %v181 = vlaneseq
  %v182 = vshrl.u32 %v181, 7
  %v183 = vsub.s32 0, %v182
  %v184 = vrot.slane %v141, %v183
  %187 = vbcast.lane.b32.xlu0 %v156, 256
  %v188 = vpop.permute.xlu0 %187
  %v190 = vmul.f32 %v180, %v188
  %v191 = vmul.f32 %v184, %v188
  %v192 = vlaneseq
  %v193 = vshrl.u32 %v192, 7
  %v194 = vsub.s32 0, %v193
  %v195 = vrot.slane %v148, %v194
  %v196 = vlaneseq
  %v197 = vshrl.u32 %v196, 7
  %v198 = vsub.s32 0, %v197
  %v199 = vrot.slane %v151, %v198
  %202 = vbcast.lane.b32.xlu0 %v160, 256
  %v203 = vpop.permute.xlu0 %202
  %v205 = vmul.f32 %v195, %v203
  %v206 = vmul.f32 %v199, %v203
  %v207 = vadd.f32 %v190, %v205
  %v208 = vadd.f32 %v191, %v206
  %v210 = vrot.slane %v152, 5
  %s211 = vtos %v210
  %v212 = vstv %s211
  %v214 = vmul.f32 %v212, %v164
  %217 = vbcast.lane.b32.xlu0 %v214, 256
  %v218 = vpop.permute.xlu0 %217
  %v220 = vadd.f32 %v207, %v218
  %v221 = vadd.f32 %v208, %v218
  %222 = vrot.lane.b32.xlu0 %v210, 127
  %v223 = vpop.permute.xlu0 %222
  %s224 = vtos %v223
  %v225 = vstv %s224
  %v227 = vmul.f32 %v225, %v168
  %230 = vbcast.lane.b32.xlu0 %v227, 256
  %v231 = vpop.permute.xlu0 %230
  %v233 = vadd.f32 %v220, %v231
  %v234 = vadd.f32 %v221, %v231
  %237 = vbcast.lane.b32.xlu0 %v172, 256
  %v238 = vpop.permute.xlu0 %237
  %v240 = vadd.f32 %v233, %v238
  %v241 = vadd.f32 %v234, %v238
  %v242 = vxor.u32 %v240, 2147483648
  %v243 = vxor.u32 %v241, 2147483648
  %v244 = vmul.f32 %v242, 1.442695
  %v245 = vpow.pop %v244
  %v246 = vmul.f32 %v243, 1.442695
  %v247 = vpow.pop %v246
  %v248 = vadd.f32 %v245, 1.0
  %v249 = vadd.f32 %v247, 1.0
  %v250 = vrcp.pop %v248
  %v251 = vmul.f32 1.0, %v250
  %v252 = vrcp.pop %v249
  %v253 = vmul.f32 1.0, %v252
  %v254 = vtanh.pop %v240
  %v255 = vtanh.pop %v241
  %s258 = sor.u32 256, 254
  %259 = vbcast.lane.b32.xlu0 %v176, %s258
  %v260 = vpop.permute.xlu0 %259
  %v262 = vmul.f32 %v251, %v260
  %v263 = vmul.f32 %v253, %v260
  %v266 = vrot.slane %v254, 4
  %v267 = vrot.slane %v255, 4
  %v270 = vmul.f32 %v251, %v266
  %v271 = vmul.f32 %v253, %v267
  %v274 = vrot.slane %v270, 6
  %v275 = vrot.slane %v271, 6
  %v278 = vadd.f32 %v262, %v274
  %v279 = vadd.f32 %v263, %v275
  %v280 = vtanh.pop %v278
  %v281 = vtanh.pop %v279
  %v284 = vrot.slane %v280, 4
  %v285 = vrot.slane %v281, 4
  %v288 = vmul.f32 %v251, %v284
  %v289 = vmul.f32 %v253, %v285
  %v290 = vlaneseq
  %v291 = vshrl.u32 %v290, 7
  %v292 = vsub.s32 1, %v291
  %v293 = vrot.slane %v138, %v292
  %v294 = vlaneseq
  %v295 = vshrl.u32 %v294, 7
  %v296 = vsub.s32 1, %v295
  %v297 = vrot.slane %v141, %v296
  %v298 = vmul.f32 %v293, %v188
  %v299 = vmul.f32 %v297, %v188
  %v300 = vlaneseq
  %v301 = vshrl.u32 %v300, 7
  %v302 = vsub.s32 1, %v301
  %v303 = vrot.slane %v148, %v302
  %v304 = vlaneseq
  %v305 = vshrl.u32 %v304, 7
  %v306 = vsub.s32 1, %v305
  %v307 = vrot.slane %v151, %v306
  %v308 = vmul.f32 %v303, %v203
  %v309 = vmul.f32 %v307, %v203
  %v310 = vadd.f32 %v298, %v308
  %v311 = vadd.f32 %v299, %v309
  %v312 = vlaneseq
  %v313 = vshrl.u32 %v312, 7
  %v314 = vsub.s32 6, %v313
  %v315 = vrot.slane %v288, %v314
  %v316 = vlaneseq
  %v317 = vshrl.u32 %v316, 7
  %v318 = vsub.s32 6, %v317
  %v319 = vrot.slane %v289, %v318
  %322 = vbcast.lane.b32.xlu0 %v164, 256
  %v323 = vpop.permute.xlu0 %322
  %v325 = vmul.f32 %v315, %v323
  %v326 = vmul.f32 %v319, %v323
  %v327 = vadd.f32 %v310, %v325
  %v328 = vadd.f32 %v311, %v326
  %v329 = vlaneseq
  %v330 = vshrl.u32 %v329, 7
  %v331 = vsub.s32 7, %v330
  %v332 = vrot.slane %v288, %v331
  %v333 = vlaneseq
  %v334 = vshrl.u32 %v333, 7
  %v335 = vsub.s32 7, %v334
  %v336 = vrot.slane %v289, %v335
  %339 = vbcast.lane.b32.xlu0 %v168, 256
  %v340 = vpop.permute.xlu0 %339
  %v342 = vmul.f32 %v332, %v340
  %v343 = vmul.f32 %v336, %v340
  %v344 = vadd.f32 %v327, %v342
  %v345 = vadd.f32 %v328, %v343
  %v346 = vadd.f32 %v344, %v238
  %v347 = vadd.f32 %v345, %v238
  %v348 = vxor.u32 %v346, 2147483648
  %v349 = vxor.u32 %v347, 2147483648
  %v350 = vmul.f32 %v348, 1.442695
  %v351 = vpow.pop %v350
  %v352 = vmul.f32 %v349, 1.442695
  %v353 = vpow.pop %v352
  %v354 = vadd.f32 %v351, 1.0
  %v355 = vadd.f32 %v353, 1.0
  %v356 = vrcp.pop %v354
  %v357 = vmul.f32 1.0, %v356
  %v358 = vrcp.pop %v355
  %v359 = vmul.f32 1.0, %v358
  %v360 = vtanh.pop %v346
  %v361 = vtanh.pop %v347
  %v362 = vmul.f32 %v357, %v278
  %v363 = vmul.f32 %v359, %v279
  %v366 = vrot.slane %v360, 4
  %v367 = vrot.slane %v361, 4
  %v370 = vmul.f32 %v357, %v366
  %v371 = vmul.f32 %v359, %v367
  %v374 = vrot.slane %v370, 6
  %v375 = vrot.slane %v371, 6
  %v378 = vadd.f32 %v362, %v374
  %v379 = vadd.f32 %v363, %v375
  %v380 = vtanh.pop %v378
  %v381 = vtanh.pop %v379
  %v384 = vrot.slane %v380, 4
  %v385 = vrot.slane %v381, 4
  %v388 = vmul.f32 %v357, %v384
  %v389 = vmul.f32 %v359, %v385
  %v390 = vlaneseq
  %v391 = vshrl.u32 %v390, 7
  %v392 = vsub.s32 2, %v391
  %v393 = vrot.slane %v138, %v392
  %v394 = vlaneseq
  %v395 = vshrl.u32 %v394, 7
  %v396 = vsub.s32 2, %v395
  %v397 = vrot.slane %v141, %v396
  %v398 = vmul.f32 %v393, %v188
  %v399 = vmul.f32 %v397, %v188
  %v400 = vlaneseq
  %v401 = vshrl.u32 %v400, 7
  %v402 = vsub.s32 2, %v401
  %v403 = vrot.slane %v148, %v402
  %v404 = vlaneseq
  %v405 = vshrl.u32 %v404, 7
  %v406 = vsub.s32 2, %v405
  %v407 = vrot.slane %v151, %v406
  %v408 = vmul.f32 %v403, %v203
  %v409 = vmul.f32 %v407, %v203
  %v410 = vadd.f32 %v398, %v408
  %v411 = vadd.f32 %v399, %v409
  %v412 = vlaneseq
  %v413 = vshrl.u32 %v412, 7
  %v414 = vsub.s32 6, %v413
  %v415 = vrot.slane %v388, %v414
  %v416 = vlaneseq
  %v417 = vshrl.u32 %v416, 7
  %v418 = vsub.s32 6, %v417
  %v419 = vrot.slane %v389, %v418
  %v420 = vmul.f32 %v415, %v323
  %v421 = vmul.f32 %v419, %v323
  %v422 = vadd.f32 %v410, %v420
  %v423 = vadd.f32 %v411, %v421
  %v424 = vlaneseq
  %v425 = vshrl.u32 %v424, 7
  %v426 = vsub.s32 7, %v425
  %v427 = vrot.slane %v388, %v426
  %v428 = vlaneseq
  %v429 = vshrl.u32 %v428, 7
  %v430 = vsub.s32 7, %v429
  %v431 = vrot.slane %v389, %v430
  %v432 = vmul.f32 %v427, %v340
  %v433 = vmul.f32 %v431, %v340
  %v434 = vadd.f32 %v422, %v432
  %v435 = vadd.f32 %v423, %v433
  %v436 = vadd.f32 %v434, %v238
  %v437 = vadd.f32 %v435, %v238
  %v438 = vxor.u32 %v436, 2147483648
  %v439 = vxor.u32 %v437, 2147483648
  %v440 = vmul.f32 %v438, 1.442695
  %v441 = vpow.pop %v440
  %v442 = vmul.f32 %v439, 1.442695
  %v443 = vpow.pop %v442
  %v444 = vadd.f32 %v441, 1.0
  %v445 = vadd.f32 %v443, 1.0
  %v446 = vrcp.pop %v444
  %v447 = vmul.f32 1.0, %v446
  %v448 = vrcp.pop %v445
  %v449 = vmul.f32 1.0, %v448
  %v450 = vtanh.pop %v436
  %v451 = vtanh.pop %v437
  %v452 = vmul.f32 %v447, %v378
  %v453 = vmul.f32 %v449, %v379
  %v456 = vrot.slane %v450, 4
  %v457 = vrot.slane %v451, 4
  %v460 = vmul.f32 %v447, %v456
  %v461 = vmul.f32 %v449, %v457
  %v464 = vrot.slane %v460, 6
  %v465 = vrot.slane %v461, 6
  %v468 = vadd.f32 %v452, %v464
  %v469 = vadd.f32 %v453, %v465
  %v470 = vtanh.pop %v468
  %v471 = vtanh.pop %v469
  %v474 = vrot.slane %v470, 4
  %v475 = vrot.slane %v471, 4
  %v478 = vmul.f32 %v447, %v474
  %v479 = vmul.f32 %v449, %v475
  %v480 = vlaneseq
  %v481 = vshrl.u32 %v480, 7
  %v482 = vsub.s32 3, %v481
  %v483 = vrot.slane %v138, %v482
  %v484 = vlaneseq
  %v485 = vshrl.u32 %v484, 7
  %v486 = vsub.s32 3, %v485
  %v487 = vrot.slane %v141, %v486
  %v488 = vmul.f32 %v483, %v188
  %v489 = vmul.f32 %v487, %v188
  %v490 = vlaneseq
  %v491 = vshrl.u32 %v490, 7
  %v492 = vsub.s32 3, %v491
  %v493 = vrot.slane %v148, %v492
  %v494 = vlaneseq
  %v495 = vshrl.u32 %v494, 7
  %v496 = vsub.s32 3, %v495
  %v497 = vrot.slane %v151, %v496
  %v498 = vmul.f32 %v493, %v203
  %v499 = vmul.f32 %v497, %v203
  %v500 = vadd.f32 %v488, %v498
  %v501 = vadd.f32 %v489, %v499
  %v502 = vlaneseq
  %v503 = vshrl.u32 %v502, 7
  %v504 = vsub.s32 6, %v503
  %v505 = vrot.slane %v478, %v504
  %v506 = vlaneseq
  %v507 = vshrl.u32 %v506, 7
  %v508 = vsub.s32 6, %v507
  %v509 = vrot.slane %v479, %v508
  %v510 = vmul.f32 %v505, %v323
  %v511 = vmul.f32 %v509, %v323
  %v512 = vadd.f32 %v500, %v510
  %v513 = vadd.f32 %v501, %v511
  %v514 = vlaneseq
  %v515 = vshrl.u32 %v514, 7
  %v516 = vsub.s32 7, %v515
  %v517 = vrot.slane %v478, %v516
  %v518 = vlaneseq
  %v519 = vshrl.u32 %v518, 7
  %v520 = vsub.s32 7, %v519
  %v521 = vrot.slane %v479, %v520
  %v522 = vmul.f32 %v517, %v340
  %v523 = vmul.f32 %v521, %v340
  %v524 = vadd.f32 %v512, %v522
  %v525 = vadd.f32 %v513, %v523
  %v526 = vadd.f32 %v524, %v238
  %v527 = vadd.f32 %v525, %v238
  %v528 = vxor.u32 %v526, 2147483648
  %v529 = vxor.u32 %v527, 2147483648
  %v530 = vmul.f32 %v528, 1.442695
  %v531 = vpow.pop %v530
  %v532 = vmul.f32 %v529, 1.442695
  %v533 = vpow.pop %v532
  %v534 = vadd.f32 %v531, 1.0
  %v535 = vadd.f32 %v533, 1.0
  %v536 = vrcp.pop %v534
  %v537 = vmul.f32 1.0, %v536
  %v538 = vrcp.pop %v535
  %v539 = vmul.f32 1.0, %v538
  %v540 = vtanh.pop %v526
  %v541 = vtanh.pop %v527
  %v542 = vmul.f32 %v537, %v468
  %v543 = vmul.f32 %v539, %v469
  %v546 = vrot.slane %v540, 4
  %v547 = vrot.slane %v541, 4
  %v550 = vmul.f32 %v537, %v546
  %v551 = vmul.f32 %v539, %v547
  %v554 = vrot.slane %v550, 6
  %v555 = vrot.slane %v551, 6
  %v558 = vadd.f32 %v542, %v554
  %v559 = vadd.f32 %v543, %v555
  %v560 = vtanh.pop %v558
  %v561 = vtanh.pop %v559
  %v564 = vrot.slane %v560, 4
  %v565 = vrot.slane %v561, 4
  %v568 = vmul.f32 %v537, %v564
  %v569 = vmul.f32 %v539, %v565
  %v570 = vld [vmem:[%s4] sm:$0x3]
  %v572 = vlaneseq
  %v573 = vshrl.u32 %v572, 7
  %v574 = vsub.s32 0, %v573
  %v575 = vrot.slane %v570, %v574
  %s577 = sor.u32 256, 250
  %578 = vbcast.lane.b32.xlu0 %v575, %s577
  %v579 = vpop.permute.xlu0 %578
  %v580 = vlaneseq
  %v581 = vshrl.u32 %v580, 7
  %v582 = vsub.s32 1, %v581
  %v583 = vrot.slane %v570, %v582
  %s585 = sor.u32 256, 250
  %586 = vbcast.lane.b32.xlu0 %v583, %s585
  %v587 = vpop.permute.xlu0 %586
  %v590 = vadd.f32 %v568, %v579
  %v591 = vadd.f32 %v569, %v587
  %594 = vset.pattern.permute.xlu0 0
  %595 = vperm.xlu0 %594, %v590
  %v596 = vpop.permute.xlu0 %595
  %597 = vset.pattern.permute.xlu0 0
  %598 = vperm.xlu0 %597, %v591
  %v599 = vpop.permute.xlu0 %598
  %v600 = vlaneseq
  %v601 = vand.u32 %v600, 127
  %v602 = vlaneseq
  %v603 = vshrl.u32 %v602, 7
  %v604 = vsub.s32 %v601, %v603
  %v605 = vrot.slane %v596, %v604
  %v606 = vlaneseq
  %v607 = vshrl.u32 %v606, 7
  %v608 = vsub.s32 %v601, %v607
  %v609 = vrot.slane %v599, %v608
  %vm610 = vcmask 1041409
  %v611 = vsel %vm610, %v609, %v605
  %vm613 = vcmask 58416
  %v614 = vsel %vm613, %v611, -inf
  %615 = vmax.xlane.f32.xlu0 %v614
  %v616 = vpop.xlane.xlu0 %615
  %v618 = vlaneseq
  %v619 = vshrl.u32 %v618, 7
  %v620 = vsub.s32 0, %v619
  %v621 = vrot.slane %v616, %v620
  %v622 = vlaneseq
  %v623 = vshrl.u32 %v622, 7
  %v624 = vsub.s32 1, %v623
  %v625 = vrot.slane %v616, %v624
  %v628 = vsub.f32 %v590, %v621
  %v629 = vsub.f32 %v591, %v625
  %v630 = vmul.f32 %v628, 1.442695
  %v631 = vpow.pop %v630
  %v632 = vmul.f32 %v629, 1.442695
  %v633 = vpow.pop %v632
  %636 = vset.pattern.permute.xlu0 0
  %637 = vperm.xlu0 %636, %v631
  %v638 = vpop.permute.xlu0 %637
  %639 = vset.pattern.permute.xlu0 0
  %640 = vperm.xlu0 %639, %v633
  %v641 = vpop.permute.xlu0 %640
  %v642 = vadd.s32 %v601, 6
  %v643 = vlaneseq
  %v644 = vshrl.u32 %v643, 7
  %v645 = vsub.s32 %v642, %v644
  %v646 = vrot.slane %v638, %v645
  %v647 = vlaneseq
  %v648 = vshrl.u32 %v647, 7
  %v649 = vsub.s32 %v642, %v648
  %v650 = vrot.slane %v641, %v649
  %v651 = vsel %vm610, %v650, %v646
  %vm653 = vcmask 9216
  %v654 = vsel %vm653, %v651, 0.0
  %655 = vadd.xlane.f32.xlu0 %v654
  %v656 = vpop.xlane.xlu0 %655
  %v658 = vlaneseq
  %v659 = vshrl.u32 %v658, 7
  %v660 = vsub.s32 0, %v659
  %v661 = vrot.slane %v656, %v660
  %v662 = vlaneseq
  %v663 = vshrl.u32 %v662, 7
  %v664 = vsub.s32 1, %v663
  %v665 = vrot.slane %v656, %v664
  %v668 = vrcp.pop %v661
  %v669 = vmul.f32 %v631, %v668
  %v670 = vrcp.pop %v665
  %v671 = vmul.f32 %v633, %v670
  %vm672 = vcmp.gt.f32.partialorder %v669, 0.125
  %vm673 = vcmp.gt.f32.partialorder %v671, 0.125
  %v674 = vsel %vm672, 1, 0
  %v675 = vsel %vm673, 1, 0
  %v676 = vcvt.s32.f32 %v674
  %v677 = vcvt.s32.f32 %v675
  %v680 = vrot.slane %v677, 7
  %vm683 = vcmask 7175
  %684 = vst.msk [vmem:[%s6 - $0x7] sm:$0x80] %vm683, %v676
  %vm685 = vcmask 0
  %686 = vst.msk [vmem:[%s6 + $0x1] sm:$0x1] %vm685, %v680
  // Predicated region
  $region26: #{selector_forward.3} parent=0 // pred_check
    _
  $region27: #{selector_forward.3} parent=0 // pred_check_branch
    %688 = sbr.rel (0) target = $region29
  $region28: #{selector_forward.3} parent=0 // pred_region
    _
  $region29: #{selector_forward.3} parent=0 // pred_fallthru
    _
  // Predicated region
  $region30: #{selector_forward.3} parent=0 // pred_check
    _
  $region31: #{selector_forward.3} parent=0 // pred_check_branch
    %690 = sbr.rel (0) target = $region33
  $region32: #{selector_forward.3} parent=0 // pred_region
    _
  $region33: #{selector_forward.3} parent=0 // pred_fallthru
    _

</llo_original>
